<compile_context>
chip_gen: v7x
topology: tpu7x:2x2x1
jax: 0.10.0
libtpu: 0.0.40
codegen_flags: <defaults>
</compile_context>

<pallas_src>
import jax
import jax.numpy as jnp
from jax.experimental import pallas as pl
from jax.experimental.pallas import tpu as pltpu

BN_EPS = 1e-5
LANE = 128


def _round_up(n, m):
    return ((n + m - 1) // m) * m


def _bn_relu(h, gamma, beta):
    # BatchNorm1d training-mode semantics: batch statistics, biased variance.
    # Padded lanes carry gamma = beta = 0, so scale = shift = 0 and those
    # lanes stay exactly 0 through the ReLU (invariant: padded rows of the
    # packed P array must remain zero).
    mean = jnp.mean(h, axis=0, keepdims=True)
    centered = h - mean
    var = jnp.mean(centered * centered, axis=0, keepdims=True)
    scale = gamma * jax.lax.rsqrt(var + BN_EPS)     # gamma * inv_std
    shift = beta - mean * scale                     # beta  - mean * scale
    return jnp.maximum(h * scale + shift, 0.0)


def _make_kernel(h1p, h2p, out_dim, matmul_dtype):
    """Build the fused kernel; h1p/h2p/out_dim are static (padded) widths."""

    def kernel(x_ref, w1_ref, w2_ref, w3_ref, p_ref, o_ref):
        def mxu(a, w_ref):
            return jnp.dot(a.astype(matmul_dtype), w_ref[...],
                           preferred_element_type=jnp.float32)

        # Packed small vectors: rows [g1, be1, g2, be2, b3, 0, 0, 0].
        g1 = p_ref[0:1, :h1p]
        be1 = p_ref[1:2, :h1p]
        g2 = p_ref[2:3, :h2p]
        be2 = p_ref[3:4, :h2p]
        b3 = p_ref[4:5, :out_dim]

        # layer1: Linear (bias cancelled by BN) + BN + ReLU
        h1 = _bn_relu(mxu(x_ref[...], w1_ref), g1, be1)
        # layer2: Linear (bias cancelled by BN) + BN + ReLU
        h2 = _bn_relu(mxu(h1, w2_ref), g2, be2)
        # layer3: Linear (bias kept)
        o_ref[...] = (mxu(h2, w3_ref) + b3).astype(o_ref.dtype)

    return kernel


def build_mlp(params, *, matmul_dtype=jnp.bfloat16):
    """One-time parameter prep; returns a jitted forward(x) -> (batch, out_dim).

    All padding / packing / casting happens here exactly once, so repeated
    calls to the returned forward() are a single pallas_call dispatch.
    """
    (w1, b1, g1, be1, w2, b2, g2, be2, w3, b3) = params
    del b1, b2  # training-mode BN subtracts the batch mean -> biases cancel

    in_dim, n_h1 = w1.shape
    n_h2 = w2.shape[1]
    out_dim = w3.shape[1]

    # Pad only the hidden (intermediate) feature axes to 128-lane multiples so
    # the intermediate activations / BN reductions are lane-dense.  The input
    # K axis (sublanes) and the small HBM-facing output stay unpadded.
    h1p = _round_up(n_h1, LANE)
    h2p = _round_up(n_h2, LANE)
    wmax = max(h1p, h2p, _round_up(out_dim, LANE))

    w1p = jnp.pad(w1, ((0, 0), (0, h1p - n_h1))).astype(matmul_dtype)
    w2p = jnp.pad(w2, ((0, h1p - n_h1), (0, h2p - n_h2))).astype(matmul_dtype)
    w3p = jnp.pad(w3, ((0, h2p - n_h2), (0, 0))).astype(matmul_dtype)

    # Pack the 5 tiny per-feature vectors into ONE (8, wmax) array -> one DMA.
    P = jnp.zeros((8, wmax), jnp.float32)
    P = P.at[0, :n_h1].set(g1.reshape(-1))
    P = P.at[1, :n_h1].set(be1.reshape(-1))
    P = P.at[2, :n_h2].set(g2.reshape(-1))
    P = P.at[3, :n_h2].set(be2.reshape(-1))
    P = P.at[4, :out_dim].set(b3.reshape(-1))

    kernel = _make_kernel(h1p, h2p, out_dim, matmul_dtype)
    vmem = pl.BlockSpec(memory_space=pltpu.MemorySpace.VMEM)

    @jax.jit
    def forward(x):
        batch = x.shape[0]
        return pl.pallas_call(
            kernel,
            out_shape=jax.ShapeDtypeStruct((batch, out_dim), jnp.float32),
            in_specs=[vmem] * 5,
            out_specs=vmem,
        )(x, w1p, w2p, w3p, P)

    return forward


def init_params(key, in_dim, n_hidden_1, n_hidden_2, out_dim):
    """Deterministic synthetic parameter init (shapes match the PyTorch module).

    Linear weights are stored transposed as (in_features, out_features)."""
    ks = jax.random.split(key, 6)

    def linear(kw, kb, fan_in, fan_out):
        bound = 1.0 / jnp.sqrt(fan_in)
        w = jax.random.uniform(kw, (fan_in, fan_out), jnp.float32, -bound, bound)
        b = jax.random.uniform(kb, (fan_out,), jnp.float32, -bound, bound)
        return w, b

    w1, b1 = linear(ks[0], ks[1], in_dim, n_hidden_1)
    w2, b2 = linear(ks[2], ks[3], n_hidden_1, n_hidden_2)
    w3, b3 = linear(ks[4], ks[5], n_hidden_2, out_dim)

    # BatchNorm1d affine params: gamma=1, beta=0 (PyTorch default init).
    g1 = jnp.ones((n_hidden_1,), jnp.float32)
    be1 = jnp.zeros((n_hidden_1,), jnp.float32)
    g2 = jnp.ones((n_hidden_2,), jnp.float32)
    be2 = jnp.zeros((n_hidden_2,), jnp.float32)

    return (w1, b1, g1, be1, w2, b2, g2, be2, w3, b3)


def reference_forward(x, params):
    """Pure-JAX f32 reference for correctness checking."""
    (w1, b1, g1, be1, w2, b2, g2, be2, w3, b3) = params

    def bn_relu(h, g, be):
        m = jnp.mean(h, axis=0, keepdims=True)
        v = jnp.mean((h - m) ** 2, axis=0, keepdims=True)
        return jnp.maximum((h - m) / jnp.sqrt(v + BN_EPS) * g + be, 0.0)

    h1 = bn_relu(x @ w1 + b1, g1, be1)
    h2 = bn_relu(h1 @ w2 + b2, g2, be2)
    return h2 @ w3 + b3


if __name__ == "__main__":
    batch, in_dim, n_hidden_1, n_hidden_2, out_dim = 8, 32, 64, 128, 16

    key = jax.random.PRNGKey(0)
    kx, kp = jax.random.split(key)
    x = jax.random.normal(kx, (batch, in_dim), jnp.float32)
    params = init_params(kp, in_dim, n_hidden_1, n_hidden_2, out_dim)

    ref = reference_forward(x, params)

    # Exact-precision path (f32 matmuls) -> must match f32 reference tightly.
    fwd_f32 = build_mlp(params, matmul_dtype=jnp.float32)
    out = jax.block_until_ready(fwd_f32(x))
    assert out.shape == (batch, out_dim)
    assert jnp.allclose(out, ref, atol=1e-4, rtol=1e-4), "f32 path mismatch"

    # Default fast path (bf16 MXU matmuls, f32 BN stats) -> looser tolerance.
    fwd_bf16 = build_mlp(params)
    out_bf16 = jax.block_until_ready(fwd_bf16(x))
    assert out_bf16.shape == (batch, out_dim)
    assert jnp.allclose(out_bf16, ref, atol=5e-2, rtol=5e-2), "bf16 path mismatch"

    print("KERNEL_OK")
</pallas_src>

<mosaic_0001>
module attributes {stable_mosaic.version = 11 : i64} {
  func.func @kernel(%arg0: memref<8x32xf32, #tpu.memory_space<vmem>>, %arg1: memref<32x128xf32, #tpu.memory_space<vmem>>, %arg2: memref<128x128xf32, #tpu.memory_space<vmem>>, %arg3: memref<128x16xf32, #tpu.memory_space<vmem>>, %arg4: memref<8x128xf32, #tpu.memory_space<vmem>>, %arg5: memref<8x16xf32, #tpu.memory_space<vmem>>) attributes {dimension_semantics = [], scalar_prefetch = 0 : i64, scratch_operands = 0 : i64, tpu.core_type = #tpu.core_type<tc>} {
    %c0 = arith.constant 0 : index
    %c0_0 = arith.constant 0 : index
    %0 = vector.load %arg4[%c0, %c0_0] : memref<8x128xf32, #tpu.memory_space<vmem>>, vector<1x128xf32>
    %c1 = arith.constant 1 : index
    %c0_1 = arith.constant 0 : index
    %1 = vector.load %arg4[%c1, %c0_1] : memref<8x128xf32, #tpu.memory_space<vmem>>, vector<1x128xf32>
    %c2 = arith.constant 2 : index
    %c0_2 = arith.constant 0 : index
    %2 = vector.load %arg4[%c2, %c0_2] : memref<8x128xf32, #tpu.memory_space<vmem>>, vector<1x128xf32>
    %c3 = arith.constant 3 : index
    %c0_3 = arith.constant 0 : index
    %3 = vector.load %arg4[%c3, %c0_3] : memref<8x128xf32, #tpu.memory_space<vmem>>, vector<1x128xf32>
    %c4 = arith.constant 4 : index
    %c0_4 = arith.constant 0 : index
    %4 = vector.load %arg4[%c4, %c0_4] : memref<8x128xf32, #tpu.memory_space<vmem>>, vector<1x16xf32>
    %c0_5 = arith.constant 0 : index
    %c0_6 = arith.constant 0 : index
    %5 = vector.load %arg0[%c0_5, %c0_6] : memref<8x32xf32, #tpu.memory_space<vmem>>, vector<8x32xf32>
    %c0_7 = arith.constant 0 : index
    %c0_8 = arith.constant 0 : index
    %6 = vector.load %arg1[%c0_7, %c0_8] : memref<32x128xf32, #tpu.memory_space<vmem>>, vector<32x128xf32>
    %cst = arith.constant dense<0.000000e+00> : vector<8x128xf32>
    %7 = tpu.matmul %5, %6, %cst {dimension_numbers = #tpu.dot_dimension_numbers<[1], [0], [0], [1], [0, 0, 1, 1], [], []>} : vector<8x32xf32>, vector<32x128xf32>, vector<8x128xf32> -> vector<8x128xf32>
    %cst_9 = arith.constant dense<0.000000e+00> : vector<128xf32>
    %8 = vector.multi_reduction <add>, %7, %cst_9 [0] : vector<8x128xf32> to vector<128xf32>
    %9 = vector.shape_cast %8 : vector<128xf32> to vector<1x128xf32>
    %cst_10 = arith.constant 8.000000e+00 : f32
    %10 = vector.broadcast %cst_10 : f32 to vector<1x128xf32>
    %11 = arith.divf %9, %10 : vector<1x128xf32>
    %12 = vector.broadcast %11 : vector<1x128xf32> to vector<8x128xf32>
    %13 = arith.subf %7, %12 : vector<8x128xf32>
    %14 = arith.mulf %13, %13 : vector<8x128xf32>
    %cst_11 = arith.constant dense<0.000000e+00> : vector<128xf32>
    %15 = vector.multi_reduction <add>, %14, %cst_11 [0] : vector<8x128xf32> to vector<128xf32>
    %16 = vector.shape_cast %15 : vector<128xf32> to vector<1x128xf32>
    %cst_12 = arith.constant 8.000000e+00 : f32
    %17 = vector.broadcast %cst_12 : f32 to vector<1x128xf32>
    %18 = arith.divf %16, %17 : vector<1x128xf32>
    %cst_13 = arith.constant 9.99999974E-6 : f32
    %19 = vector.broadcast %cst_13 : f32 to vector<1x128xf32>
    %20 = arith.addf %18, %19 : vector<1x128xf32>
    %21 = math.rsqrt %20 : vector<1x128xf32>
    %22 = arith.mulf %0, %21 : vector<1x128xf32>
    %23 = arith.mulf %11, %22 : vector<1x128xf32>
    %24 = arith.subf %1, %23 : vector<1x128xf32>
    %25 = vector.broadcast %22 : vector<1x128xf32> to vector<8x128xf32>
    %26 = arith.mulf %7, %25 : vector<8x128xf32>
    %27 = vector.broadcast %24 : vector<1x128xf32> to vector<8x128xf32>
    %28 = arith.addf %26, %27 : vector<8x128xf32>
    %cst_14 = arith.constant 0.000000e+00 : f32
    %29 = vector.broadcast %cst_14 : f32 to vector<8x128xf32>
    %30 = arith.maximumf %28, %29 : vector<8x128xf32>
    %c0_15 = arith.constant 0 : index
    %c0_16 = arith.constant 0 : index
    %31 = vector.load %arg2[%c0_15, %c0_16] : memref<128x128xf32, #tpu.memory_space<vmem>>, vector<128x128xf32>
    %cst_17 = arith.constant dense<0.000000e+00> : vector<8x128xf32>
    %32 = tpu.matmul %30, %31, %cst_17 {dimension_numbers = #tpu.dot_dimension_numbers<[1], [0], [0], [1], [0, 0, 1, 1], [], []>} : vector<8x128xf32>, vector<128x128xf32>, vector<8x128xf32> -> vector<8x128xf32>
    %cst_18 = arith.constant dense<0.000000e+00> : vector<128xf32>
    %33 = vector.multi_reduction <add>, %32, %cst_18 [0] : vector<8x128xf32> to vector<128xf32>
    %34 = vector.shape_cast %33 : vector<128xf32> to vector<1x128xf32>
    %cst_19 = arith.constant 8.000000e+00 : f32
    %35 = vector.broadcast %cst_19 : f32 to vector<1x128xf32>
    %36 = arith.divf %34, %35 : vector<1x128xf32>
    %37 = vector.broadcast %36 : vector<1x128xf32> to vector<8x128xf32>
    %38 = arith.subf %32, %37 : vector<8x128xf32>
    %39 = arith.mulf %38, %38 : vector<8x128xf32>
    %cst_20 = arith.constant dense<0.000000e+00> : vector<128xf32>
    %40 = vector.multi_reduction <add>, %39, %cst_20 [0] : vector<8x128xf32> to vector<128xf32>
    %41 = vector.shape_cast %40 : vector<128xf32> to vector<1x128xf32>
    %cst_21 = arith.constant 8.000000e+00 : f32
    %42 = vector.broadcast %cst_21 : f32 to vector<1x128xf32>
    %43 = arith.divf %41, %42 : vector<1x128xf32>
    %cst_22 = arith.constant 9.99999974E-6 : f32
    %44 = vector.broadcast %cst_22 : f32 to vector<1x128xf32>
    %45 = arith.addf %43, %44 : vector<1x128xf32>
    %46 = math.rsqrt %45 : vector<1x128xf32>
    %47 = arith.mulf %2, %46 : vector<1x128xf32>
    %48 = arith.mulf %36, %47 : vector<1x128xf32>
    %49 = arith.subf %3, %48 : vector<1x128xf32>
    %50 = vector.broadcast %47 : vector<1x128xf32> to vector<8x128xf32>
    %51 = arith.mulf %32, %50 : vector<8x128xf32>
    %52 = vector.broadcast %49 : vector<1x128xf32> to vector<8x128xf32>
    %53 = arith.addf %51, %52 : vector<8x128xf32>
    %cst_23 = arith.constant 0.000000e+00 : f32
    %54 = vector.broadcast %cst_23 : f32 to vector<8x128xf32>
    %55 = arith.maximumf %53, %54 : vector<8x128xf32>
    %c0_24 = arith.constant 0 : index
    %c0_25 = arith.constant 0 : index
    %56 = vector.load %arg3[%c0_24, %c0_25] : memref<128x16xf32, #tpu.memory_space<vmem>>, vector<128x16xf32>
    %cst_26 = arith.constant dense<0.000000e+00> : vector<8x16xf32>
    %57 = tpu.matmul %55, %56, %cst_26 {dimension_numbers = #tpu.dot_dimension_numbers<[1], [0], [0], [1], [0, 0, 1, 1], [], []>} : vector<8x128xf32>, vector<128x16xf32>, vector<8x16xf32> -> vector<8x16xf32>
    %58 = vector.broadcast %4 : vector<1x16xf32> to vector<8x16xf32>
    %59 = arith.addf %57, %58 : vector<8x16xf32>
    %c0_27 = arith.constant 0 : index
    %c0_28 = arith.constant 0 : index
    %60 = vector.load %arg5[%c0_27, %c0_28] : memref<8x16xf32, #tpu.memory_space<vmem>>, vector<8x16xf32>
    tpu.vector_store %arg5[%c0_27, %c0_28], %59 {strides = array<i32>} : memref<8x16xf32, #tpu.memory_space<vmem>>, vector<8x16xf32>,
    return
  }
}

</mosaic_0001>

<llo_original>
// kernel: forward.1
$region0: #{forward.1}
  #allocation0 [shape = 'u32[]', space=smem, size = 0x4, offset = 0x4, fixed_abs, tag = 'smem constant byte address 0x4 - core index']
  #allocation1 [shape = 'u32[144,128]{1,0:T(1,128)}', space=vmem, size = 0x12000, scoped, tag = 'internal scratch']
  %s0 = inlined_call_operand.hbm [shape: f32[8,32], index: 0, kind: input, shape index: {}]
  %s1 = inlined_call_operand.hbm [shape: f32[32,128], index: 1, kind: input, shape index: {}]
  %s2 = inlined_call_operand.hbm [shape: f32[128,128], index: 2, kind: input, shape index: {}]
  %s3 = inlined_call_operand.hbm [shape: f32[128,16], index: 3, kind: input, shape index: {}]
  %s4 = inlined_call_operand.vmem [shape: f32[8,128], index: 4, kind: input, shape index: {}]
  %s5 = inlined_call_operand.hbm [shape: f32[8,16], index: 5, kind: output, shape index: {}]
  %s6 = sld [smem:[#allocation0]]
  $region46: #{forward.1} parent=0
    _
  %s8 = ssub.s32 1, %s6
  %s9 = scalar_select 0, %s8, %s6
  $region1: #{forward.1} parent=0
    #allocation2 [shape = 'u8[4096]{0}', space=vmem, size = 0x1000, scoped, tag = 'input window, operand 0, single buffered']
    #allocation3 [shape = 's32[1]{0}', space=sflag, size = 0x4, scoped, tag = 'scoped memory for forward.1']
    #allocation4 [shape = 's32[1]{0}', space=sflag, size = 0x4, scoped, tag = 'scoped memory for forward.1']
    #allocation5 [shape = 'u8[16384]{0}', space=vmem, size = 0x4000, scoped, tag = 'input window, operand 1, single buffered']
    #allocation6 [shape = 's32[1]{0}', space=sflag, size = 0x4, scoped, tag = 'scoped memory for forward.1']
    #allocation7 [shape = 'u8[65536]{0}', space=vmem, size = 0x10000, scoped, tag = 'input window, operand 2, single buffered']
    #allocation8 [shape = 'u8[65536]{0}', space=vmem, size = 0x10000, scoped, tag = 'input window, operand 3, single buffered']
    #allocation9 [shape = 's32[1]{0}', space=sflag, size = 0x4, scoped, tag = 'scoped memory for forward.1']
    #allocation10 [shape = 'u8[4096]{0}', space=vmem, size = 0x1000, scoped, tag = 'output window, operand 0, single buffered']
    %10 = vsyncpa [#allocation3], 0
    %11 = vsyncpa [#allocation6], 0
    %12 = vsyncpa [#allocation9], 0
    %13 = vsyncpa [#allocation4], 0
    // Predicated region
    $region2: #{forward.1} parent=1 // pred_check
      _
    $region3: #{forward.1} parent=1 // pred_check_branch
      %15 = sbr.rel (0) target = $region5
    $region4: #{forward.1} parent=1 // pred_region
      %s17 = ssub.s32 128, 128
      %18 = vsyncadd [#allocation3], %s17
      %s20 = sshll.u32 [#allocation2], 4
      %s21 = int_to_ptr.vmem [resolvable:$true] %s20
      %23 = dma.hbm_to_vmem [thread:$0]  %s0, 128, %s21, [#allocation3]
    $region5: #{forward.1} parent=1 // pred_fallthru
      _
    // Predicated region
    $region6: #{forward.1} parent=1 // pred_check
      _
    $region7: #{forward.1} parent=1 // pred_check_branch
      %25 = sbr.rel (0) target = $region9
    $region8: #{forward.1} parent=1 // pred_region
      %s27 = ssub.s32 512, 512
      %28 = vsyncadd [#allocation6], %s27
      %s29 = sshll.u32 [#allocation5], 4
      %s30 = int_to_ptr.vmem [resolvable:$true] %s29
      %35 = dma.hbm_to_vmem [thread:$0]  %s1, 512, %s30, [#allocation6], 128, 128, 8
    $region9: #{forward.1} parent=1 // pred_fallthru
      _
    // Predicated region
    $region10: #{forward.1} parent=1 // pred_check
      _
    $region11: #{forward.1} parent=1 // pred_check_branch
      %37 = sbr.rel (0) target = $region13
    $region12: #{forward.1} parent=1 // pred_region
      %s39 = ssub.s32 2048, 2048
      %40 = vsyncadd [#allocation6], %s39
      %s41 = sshll.u32 [#allocation7], 4
      %s42 = int_to_ptr.vmem [resolvable:$true] %s41
      %47 = dma.hbm_to_vmem [thread:$0]  %s2, 2048, %s42, [#allocation6], 128, 128, 8
    $region13: #{forward.1} parent=1 // pred_fallthru
      _
    // Predicated region
    $region14: #{forward.1} parent=1 // pred_check
      _
    $region15: #{forward.1} parent=1 // pred_check_branch
      %49 = sbr.rel (0) target = $region17
    $region16: #{forward.1} parent=1 // pred_region
      %s51 = ssub.s32 2048, 2048
      %52 = vsyncadd [#allocation9], %s51
      %s53 = sshll.u32 [#allocation8], 4
      %s54 = int_to_ptr.vmem [resolvable:$true] %s53
      %59 = dma.hbm_to_vmem [thread:$0]  %s3, 2048, %s54, [#allocation9], 128, 128, 8
    $region17: #{forward.1} parent=1 // pred_fallthru
      _
    // Predicated region
    $region18: #{forward.1} parent=1 // pred_check
      _
    $region19: #{forward.1} parent=1 // pred_check_branch
      %61 = sbr.rel (0) target = $region21
    $region20: #{forward.1} parent=1 // pred_region
      _
    $region21: #{forward.1} parent=1 // pred_fallthru
      _
    // Predicated region
    $region22: #{forward.1} parent=1 // pred_check
      _
    $region23: #{forward.1} parent=1 // pred_check_branch
      %63 = sbr.rel (0) target = $region25
    $region24: #{forward.1} parent=1 // pred_region
      %64 = dma.done [#allocation3], 128
    $region25: #{forward.1} parent=1 // pred_fallthru
      _
    // Predicated region
    $region26: #{forward.1} parent=1 // pred_check
      _
    $region27: #{forward.1} parent=1 // pred_check_branch
      %66 = sbr.rel (0) target = $region29
    $region28: #{forward.1} parent=1 // pred_region
      %67 = dma.done [#allocation6], 512
    $region29: #{forward.1} parent=1 // pred_fallthru
      _
    // Predicated region
    $region30: #{forward.1} parent=1 // pred_check
      _
    $region31: #{forward.1} parent=1 // pred_check_branch
      %69 = sbr.rel (0) target = $region33
    $region32: #{forward.1} parent=1 // pred_region
      %70 = dma.done [#allocation6], 2048
    $region33: #{forward.1} parent=1 // pred_fallthru
      _
    // Predicated region
    $region34: #{forward.1} parent=1 // pred_check
      _
    $region35: #{forward.1} parent=1 // pred_check_branch
      %72 = sbr.rel (0) target = $region37
    $region36: #{forward.1} parent=1 // pred_region
      %73 = dma.done [#allocation9], 2048
    $region37: #{forward.1} parent=1 // pred_fallthru
      _
    %v74 = vld [vmem:[%s4] sm:$0x1]
    %v75 = vld [vmem:[%s4 + $0x1] sm:$0x1]
    %v76 = vld [vmem:[%s4 + $0x2] sm:$0x1]
    %v77 = vld [vmem:[%s4 + $0x3] sm:$0x1]
    %v78 = vld [vmem:[%s4 + $0x4] sm:$0x1]
    %v79 = vld [vmem:[#allocation2] sm:$0xff]
    %v80 = vld [vmem:[#allocation5] sm:$0xff]
    %v81 = vld [vmem:[#allocation5 + $0x8] sm:$0xff]
    %v82 = vld [vmem:[#allocation5 + $0x10] sm:$0xff]
    %v83 = vld [vmem:[#allocation5 + $0x18] sm:$0xff]
    %vm84 = vcmask 261120
    %v86 = vsel %vm84, %v79, 0
    %88 = vmatprep.subr.mxu0 0.0
    %89 = vmatpush1.msra.mxu0 %v80
    %90 = vmatprep.subr.mxu0 0.0
    %91 = vmatpush1.msra.mxu0 %v81
    %92 = vmatprep.subr.mxu0 0.0
    %93 = vmatpush1.msra.mxu0 %v82
    %94 = vmatprep.subr.mxu0 0.0
    %95 = vmatpush1.msra.mxu0 %v83
    %96 = vmatprep.subr.mxu0 0.0
    %97 = vmatpush1.msra.mxu0 0.0
    %98 = vmatprep.subr.mxu0 0.0
    %99 = vmatpush1.msra.mxu0 0.0
    %100 = vmatprep.subr.mxu0 0.0
    %101 = vmatpush1.msra.mxu0 0.0
    %102 = vmatprep.subr.mxu0 0.0
    %103 = vmatpush1.msra.mxu0 0.0
    %104 = vmatprep.subr.mxu0 0.0
    %105 = vmatpush1.msra.mxu0 0.0
    %106 = vmatprep.subr.mxu0 0.0
    %107 = vmatpush1.msra.mxu0 0.0
    %108 = vmatprep.subr.mxu0 0.0
    %109 = vmatpush1.msra.mxu0 0.0
    %110 = vmatprep.subr.mxu0 0.0
    %111 = vmatpush1.msra.mxu0 0.0
    %112 = vmatprep.subr.mxu0 0.0
    %113 = vmatpush1.msra.mxu0 0.0
    %114 = vmatprep.subr.mxu0 0.0
    %115 = vmatpush1.msra.mxu0 0.0
    %116 = vmatprep.subr.mxu0 0.0
    %117 = vmatpush1.msra.mxu0 0.0
    %118 = vmatprep.subr.mxu0 0.0
    %119 = vmatpush1.msra.mxu0 0.0
    %120 = vmatprep.subr.mxu0 0.0
    %121 = vmatpush1.msra.mxu0 0.0
    %122 = vmatprep.subr.mxu0 0.0
    %123 = vmatpush1.msra.mxu0 0.0
    %124 = vmatprep.subr.mxu0 0.0
    %125 = vmatpush1.msra.mxu0 0.0
    %126 = vmatprep.subr.mxu0 0.0
    %127 = vmatpush1.msra.mxu0 0.0
    %128 = vmatprep.subr.mxu0 0.0
    %129 = vmatpush1.msra.mxu0 0.0
    %130 = vmatprep.subr.mxu0 0.0
    %131 = vmatpush1.msra.mxu0 0.0
    %132 = vmatprep.subr.mxu0 0.0
    %133 = vmatpush1.msra.mxu0 0.0
    %134 = vmatprep.subr.mxu0 0.0
    %135 = vmatpush1.msra.mxu0 0.0
    %136 = vmatprep.subr.mxu0 0.0
    %137 = vmatpush1.msra.mxu0 0.0
    %138 = vmatprep.subr.mxu0 0.0
    %139 = vmatpush1.msra.mxu0 0.0
    %140 = vmatprep.subr.mxu0 0.0
    %141 = vmatpush1.msra.mxu0 0.0
    %142 = vmatprep.subr.mxu0 0.0
    %143 = vmatpush1.msra.mxu0 0.0
    %144 = vmatprep.subr.mxu0 0.0
    %145 = vmatpush1.msra.mxu0 0.0
    %146 = vmatprep.subr.mxu0 0.0
    %147 = vmatpush1.msra.mxu0 0.0
    %148 = vmatprep.subr.mxu0 0.0
    %149 = vmatpush1.msra.mxu0 0.0
    %150 = vmatprep.subr.mxu0 0.0
    %151 = vmatpush1.msra.mxu0 0.0
    %152 = vmatprep.mubr.f32.mxu0 0.0
    %153 = vmatmul.mubr.f32.gmra.mrb[0].mxu0 %v86
    %v154 = vpop.f32.mrb[0].mxu0
    %v155 = vadd.f32 0.0, %v154
    %v156 = vpop.f32.mrb[0].mxu0
    %157 = vdwg.mxu0
    %v158 = vrot.slane %v155, 4
    %v159 = vadd.f32 %v155, %v158
    %v160 = vrot.slane %v159, 2
    %v161 = vadd.f32 %v159, %v160
    %v162 = vrot.slane %v161, 1
    %v163 = vadd.f32 %v161, %v162
    %v164 = vrcp.pop 8.0
    %v165 = vmul.f32 %v163, %v164
    %v166 = vsub.f32 %v155, %v165
    %v167 = vmul.f32 %v166, %v166
    %v168 = vrot.slane %v167, 4
    %v169 = vadd.f32 %v167, %v168
    %v170 = vrot.slane %v169, 2
    %v171 = vadd.f32 %v169, %v170
    %v172 = vrot.slane %v171, 1
    %v173 = vadd.f32 %v171, %v172
    %v174 = vmul.f32 %v173, %v164
    %v175 = vadd.f32 %v174, 1e-05
    %v176 = vrsqrt.pop %v175
    %v177 = vmul.f32 %v74, %v176
    %v178 = vmul.f32 %v165, %v177
    %v179 = vsub.f32 %v75, %v178
    %v180 = vlaneseq
    %v181 = vshrl.u32 %v180, 7
    %v182 = vsub.s32 0, %v181
    %v183 = vrot.slane %v177, %v182
    %v184 = vmul.f32 %v155, %v183
    %v185 = vlaneseq
    %v186 = vshrl.u32 %v185, 7
    %v187 = vsub.s32 0, %v186
    %v188 = vrot.slane %v179, %v187
    %v189 = vadd.f32 %v184, %v188
    %v190 = vmax.f32 %v189, 0.0
    %v191 = vld [vmem:[#allocation7] sm:$0xff]
    %v192 = vld [vmem:[#allocation7 + $0x8] sm:$0xff]
    %v193 = vld [vmem:[#allocation7 + $0x10] sm:$0xff]
    %v194 = vld [vmem:[#allocation7 + $0x18] sm:$0xff]
    %v195 = vld [vmem:[#allocation7 + $0x20] sm:$0xff]
    %v196 = vld [vmem:[#allocation7 + $0x28] sm:$0xff]
    %v197 = vld [vmem:[#allocation7 + $0x30] sm:$0xff]
    %v198 = vld [vmem:[#allocation7 + $0x38] sm:$0xff]
    %v199 = vld [vmem:[#allocation7 + $0x40] sm:$0xff]
    %v200 = vld [vmem:[#allocation7 + $0x48] sm:$0xff]
    %v201 = vld [vmem:[#allocation7 + $0x50] sm:$0xff]
    %v202 = vld [vmem:[#allocation7 + $0x58] sm:$0xff]
    %v203 = vld [vmem:[#allocation7 + $0x60] sm:$0xff]
    %v204 = vld [vmem:[#allocation7 + $0x68] sm:$0xff]
    %v205 = vld [vmem:[#allocation7 + $0x70] sm:$0xff]
    %v206 = vld [vmem:[#allocation7 + $0x78] sm:$0xff]
    %207 = vmatprep.subr.mxu0 0.0
    %208 = vmatpush1.msra.mxu0 %v191
    %209 = vmatprep.subr.mxu0 0.0
    %210 = vmatpush1.msra.mxu0 %v192
    %211 = vmatprep.subr.mxu0 0.0
    %212 = vmatpush1.msra.mxu0 %v193
    %213 = vmatprep.subr.mxu0 0.0
    %214 = vmatpush1.msra.mxu0 %v194
    %215 = vmatprep.subr.mxu0 0.0
    %216 = vmatpush1.msra.mxu0 %v195
    %217 = vmatprep.subr.mxu0 0.0
    %218 = vmatpush1.msra.mxu0 %v196
    %219 = vmatprep.subr.mxu0 0.0
    %220 = vmatpush1.msra.mxu0 %v197
    %221 = vmatprep.subr.mxu0 0.0
    %222 = vmatpush1.msra.mxu0 %v198
    %223 = vmatprep.subr.mxu0 0.0
    %224 = vmatpush1.msra.mxu0 %v199
    %225 = vmatprep.subr.mxu0 0.0
    %226 = vmatpush1.msra.mxu0 %v200
    %227 = vmatprep.subr.mxu0 0.0
    %228 = vmatpush1.msra.mxu0 %v201
    %229 = vmatprep.subr.mxu0 0.0
    %230 = vmatpush1.msra.mxu0 %v202
    %231 = vmatprep.subr.mxu0 0.0
    %232 = vmatpush1.msra.mxu0 %v203
    %233 = vmatprep.subr.mxu0 0.0
    %234 = vmatpush1.msra.mxu0 %v204
    %235 = vmatprep.subr.mxu0 0.0
    %236 = vmatpush1.msra.mxu0 %v205
    %237 = vmatprep.subr.mxu0 0.0
    %238 = vmatpush1.msra.mxu0 %v206
    %239 = vmatprep.subr.mxu0 0.0
    %240 = vmatpush1.msra.mxu0 0.0
    %241 = vmatprep.subr.mxu0 0.0
    %242 = vmatpush1.msra.mxu0 0.0
    %243 = vmatprep.subr.mxu0 0.0
    %244 = vmatpush1.msra.mxu0 0.0
    %245 = vmatprep.subr.mxu0 0.0
    %246 = vmatpush1.msra.mxu0 0.0
    %247 = vmatprep.subr.mxu0 0.0
    %248 = vmatpush1.msra.mxu0 0.0
    %249 = vmatprep.subr.mxu0 0.0
    %250 = vmatpush1.msra.mxu0 0.0
    %251 = vmatprep.subr.mxu0 0.0
    %252 = vmatpush1.msra.mxu0 0.0
    %253 = vmatprep.subr.mxu0 0.0
    %254 = vmatpush1.msra.mxu0 0.0
    %255 = vmatprep.subr.mxu0 0.0
    %256 = vmatpush1.msra.mxu0 0.0
    %257 = vmatprep.subr.mxu0 0.0
    %258 = vmatpush1.msra.mxu0 0.0
    %259 = vmatprep.subr.mxu0 0.0
    %260 = vmatpush1.msra.mxu0 0.0
    %261 = vmatprep.subr.mxu0 0.0
    %262 = vmatpush1.msra.mxu0 0.0
    %263 = vmatprep.subr.mxu0 0.0
    %264 = vmatpush1.msra.mxu0 0.0
    %265 = vmatprep.subr.mxu0 0.0
    %266 = vmatpush1.msra.mxu0 0.0
    %267 = vmatprep.subr.mxu0 0.0
    %268 = vmatpush1.msra.mxu0 0.0
    %269 = vmatprep.subr.mxu0 0.0
    %270 = vmatpush1.msra.mxu0 0.0
    %271 = vmatprep.mubr.f32.mxu0 0.0
    %272 = vmatmul.mubr.f32.gmra.mrb[0].mxu0 %v190
    %v273 = vpop.f32.mrb[0].mxu0
    %v274 = vadd.f32 0.0, %v273
    %v275 = vpop.f32.mrb[0].mxu0
    %276 = vdwg.mxu0
    %v277 = vrot.slane %v274, 4
    %v278 = vadd.f32 %v274, %v277
    %v279 = vrot.slane %v278, 2
    %v280 = vadd.f32 %v278, %v279
    %v281 = vrot.slane %v280, 1
    %v282 = vadd.f32 %v280, %v281
    %v283 = vmul.f32 %v282, %v164
    %v284 = vsub.f32 %v274, %v283
    %v285 = vmul.f32 %v284, %v284
    %v286 = vrot.slane %v285, 4
    %v287 = vadd.f32 %v285, %v286
    %v288 = vrot.slane %v287, 2
    %v289 = vadd.f32 %v287, %v288
    %v290 = vrot.slane %v289, 1
    %v291 = vadd.f32 %v289, %v290
    %v292 = vmul.f32 %v291, %v164
    %v293 = vadd.f32 %v292, 1e-05
    %v294 = vrsqrt.pop %v293
    %v295 = vmul.f32 %v76, %v294
    %v296 = vmul.f32 %v283, %v295
    %v297 = vsub.f32 %v77, %v296
    %v298 = vlaneseq
    %v299 = vshrl.u32 %v298, 7
    %v300 = vsub.s32 0, %v299
    %v301 = vrot.slane %v295, %v300
    %v302 = vmul.f32 %v274, %v301
    %v303 = vlaneseq
    %v304 = vshrl.u32 %v303, 7
    %v305 = vsub.s32 0, %v304
    %v306 = vrot.slane %v297, %v305
    %v307 = vadd.f32 %v302, %v306
    %v308 = vmax.f32 %v307, 0.0
    %v309 = vld [vmem:[#allocation8] sm:$0xff]
    %v310 = vld [vmem:[#allocation8 + $0x8] sm:$0xff]
    %v311 = vld [vmem:[#allocation8 + $0x10] sm:$0xff]
    %v312 = vld [vmem:[#allocation8 + $0x18] sm:$0xff]
    %v313 = vld [vmem:[#allocation8 + $0x20] sm:$0xff]
    %v314 = vld [vmem:[#allocation8 + $0x28] sm:$0xff]
    %v315 = vld [vmem:[#allocation8 + $0x30] sm:$0xff]
    %v316 = vld [vmem:[#allocation8 + $0x38] sm:$0xff]
    %v317 = vld [vmem:[#allocation8 + $0x40] sm:$0xff]
    %v318 = vld [vmem:[#allocation8 + $0x48] sm:$0xff]
    %v319 = vld [vmem:[#allocation8 + $0x50] sm:$0xff]
    %v320 = vld [vmem:[#allocation8 + $0x58] sm:$0xff]
    %v321 = vld [vmem:[#allocation8 + $0x60] sm:$0xff]
    %v322 = vld [vmem:[#allocation8 + $0x68] sm:$0xff]
    %v323 = vld [vmem:[#allocation8 + $0x70] sm:$0xff]
    %v324 = vld [vmem:[#allocation8 + $0x78] sm:$0xff]
    %v325 = vlaneseq
    %v326 = vshrl.u32 %v325, 7
    %v327 = vsub.s32 0, %v326
    %v328 = vrot.slane %v78, %v327
    %329 = vmatprep.subr.mxu0 0.0
    %330 = vmatpush1.msra.mxu0 %v309
    %331 = vmatprep.subr.mxu0 0.0
    %332 = vmatpush1.msra.mxu0 %v310
    %333 = vmatprep.subr.mxu0 0.0
    %334 = vmatpush1.msra.mxu0 %v311
    %335 = vmatprep.subr.mxu0 0.0
    %336 = vmatpush1.msra.mxu0 %v312
    %337 = vmatprep.subr.mxu0 0.0
    %338 = vmatpush1.msra.mxu0 %v313
    %339 = vmatprep.subr.mxu0 0.0
    %340 = vmatpush1.msra.mxu0 %v314
    %341 = vmatprep.subr.mxu0 0.0
    %342 = vmatpush1.msra.mxu0 %v315
    %343 = vmatprep.subr.mxu0 0.0
    %344 = vmatpush1.msra.mxu0 %v316
    %345 = vmatprep.subr.mxu0 0.0
    %346 = vmatpush1.msra.mxu0 %v317
    %347 = vmatprep.subr.mxu0 0.0
    %348 = vmatpush1.msra.mxu0 %v318
    %349 = vmatprep.subr.mxu0 0.0
    %350 = vmatpush1.msra.mxu0 %v319
    %351 = vmatprep.subr.mxu0 0.0
    %352 = vmatpush1.msra.mxu0 %v320
    %353 = vmatprep.subr.mxu0 0.0
    %354 = vmatpush1.msra.mxu0 %v321
    %355 = vmatprep.subr.mxu0 0.0
    %356 = vmatpush1.msra.mxu0 %v322
    %357 = vmatprep.subr.mxu0 0.0
    %358 = vmatpush1.msra.mxu0 %v323
    %359 = vmatprep.subr.mxu0 0.0
    %360 = vmatpush1.msra.mxu0 %v324
    %361 = vmatprep.subr.mxu0 0.0
    %362 = vmatpush1.msra.mxu0 0.0
    %363 = vmatprep.subr.mxu0 0.0
    %364 = vmatpush1.msra.mxu0 0.0
    %365 = vmatprep.subr.mxu0 0.0
    %366 = vmatpush1.msra.mxu0 0.0
    %367 = vmatprep.subr.mxu0 0.0
    %368 = vmatpush1.msra.mxu0 0.0
    %369 = vmatprep.subr.mxu0 0.0
    %370 = vmatpush1.msra.mxu0 0.0
    %371 = vmatprep.subr.mxu0 0.0
    %372 = vmatpush1.msra.mxu0 0.0
    %373 = vmatprep.subr.mxu0 0.0
    %374 = vmatpush1.msra.mxu0 0.0
    %375 = vmatprep.subr.mxu0 0.0
    %376 = vmatpush1.msra.mxu0 0.0
    %377 = vmatprep.subr.mxu0 0.0
    %378 = vmatpush1.msra.mxu0 0.0
    %379 = vmatprep.subr.mxu0 0.0
    %380 = vmatpush1.msra.mxu0 0.0
    %381 = vmatprep.subr.mxu0 0.0
    %382 = vmatpush1.msra.mxu0 0.0
    %383 = vmatprep.subr.mxu0 0.0
    %384 = vmatpush1.msra.mxu0 0.0
    %385 = vmatprep.subr.mxu0 0.0
    %386 = vmatpush1.msra.mxu0 0.0
    %387 = vmatprep.subr.mxu0 0.0
    %388 = vmatpush1.msra.mxu0 0.0
    %389 = vmatprep.subr.mxu0 0.0
    %390 = vmatpush1.msra.mxu0 0.0
    %391 = vmatprep.subr.mxu0 0.0
    %392 = vmatpush1.msra.mxu0 0.0
    %393 = vmatprep.mubr.f32.mxu0 0.0
    %394 = vmatmul.mubr.f32.gmra.mrb[0].mxu0 %v308
    %v395 = vpop.f32.mrb[0].mxu0
    %v396 = vadd.f32 %v328, %v395
    %v397 = vpop.f32.mrb[0].mxu0
    %398 = vdwg.mxu0
    %vm399 = vcmask 130048
    %400 = vst.msk [vmem:[#allocation10] sm:$0xff] %vm399, %v396
    // Predicated region
    $region38: #{forward.1} parent=1 // pred_check
      _
    $region39: #{forward.1} parent=1 // pred_check_branch
      %402 = sbr.rel (0) target = $region41
    $region40: #{forward.1} parent=1 // pred_region
      %s404 = ssub.s32 128, 128
      %405 = vsyncadd [#allocation4], %s404
      %s407 = sshll.u32 [#allocation10], 4
      %s408 = int_to_ptr.vmem [resolvable:$true] %s407
      %410 = dma.vmem_to_hbm [thread:$0]  %s408, 128, %s5, [#allocation4]
    $region41: #{forward.1} parent=1 // pred_fallthru
      _
    // Predicated region
    $region42: #{forward.1} parent=1 // pred_check
      _
    $region43: #{forward.1} parent=1 // pred_check_branch
      %412 = sbr.rel (0) target = $region45
    $region44: #{forward.1} parent=1 // pred_region
      %413 = dma.done [#allocation4], 128
    $region45: #{forward.1} parent=1 // pred_fallthru
      _
    %414 = vsyncpa [#allocation3], 1
    %415 = vsyncpa [#allocation6], 1
    %416 = vsyncpa [#allocation9], 1
    %417 = vsyncpa [#allocation4], 1

</llo_original>
